<compile_context>
chip_gen: v7x
topology: tpu7x:2x2x1
jax: 0.10.0
libtpu: 0.0.40
codegen_flags: <defaults>
</compile_context>

<pallas_src>
import functools

import jax
import jax.numpy as jnp
from jax.experimental import pallas as pl
from jax.experimental.pallas import tpu as pltpu


# ----------------------------------------------------------------------------
# Kernel
# ----------------------------------------------------------------------------
def _mlp_fused_kernel(x_ref, *rest, acts, slope):
    """rest = (w0, b0, w1, b1, ..., w_{L-1}, b_{L-1}, o_ref)."""
    o_ref = rest[-1]
    wb = rest[:-1]

    h = x_ref[...].astype(jnp.float32)
    for c, act in enumerate(acts):
        w = wb[2 * c][...].astype(jnp.bfloat16)        # MXU-native operand
        b = wb[2 * c + 1][...].astype(jnp.float32)
        h = jnp.dot(h.astype(jnp.bfloat16), w,
                    preferred_element_type=jnp.float32) + b
        if act == "lrelu":
            if slope <= 1.0:
                h = jnp.maximum(h, slope * h)          # 2 VALU ops (mul+max)
            else:
                h = jnp.where(h >= 0, h, slope * h)
        elif act == "xtanh":
            h = jnp.tanh(h) + slope * h                # EUP tanh, free slot
        elif act == "sigmoid":
            h = 1.0 / (1.0 + jnp.exp(-h))              # EUP exp + divide
        elif act == "none":
            pass
        else:
            raise ValueError(f"Incorrect activation: {act}")
    o_ref[...] = h.astype(o_ref.dtype)


# ----------------------------------------------------------------------------
# Host-side wrapper
# ----------------------------------------------------------------------------
def _round_up(n, m):
    return ((n + m - 1) // m) * m


def _choose_tm(batch):
    """Batch tile: 128-aligned rows (MXU occupancy), >=2 grid steps once the
    batch is big enough (lets v7x shard across both TensorCores), capped at
    512 rows (~85% of HBM roofline per measured tiling data)."""
    b8 = _round_up(batch, 8)
    if b8 <= 256:
        return b8                               # tiny batch: single step
    tm = _round_up(-(-b8 // 2), 128)            # at least 2 steps
    return min(tm, 512)


def mlp_forward(x, weights, biases, acts, slope):
    """Fused MLP forward.

    x: [B, D_in]; weights[c]: [d_in, d_out] (transposed vs PyTorch, bf16);
    biases[c]: [1, d_out] (f32); acts: per-layer activation strings
    (last entry 'none').
    """
    B, D_in = x.shape
    n_layer = len(weights)
    out_dim = weights[-1].shape[1]

    tm = _choose_tm(B)
    B_pad = _round_up(B, tm)
    x_p = x if B_pad == B else jnp.pad(x, ((0, B_pad - B), (0, 0)))

    # Weight/bias specs: full-array blocks, constant index -> VMEM-resident
    # across grid steps; Buffered(1) because double-buffering a constant
    # block just doubles its VMEM footprint.
    wb_args = []
    wb_bytes = 0
    in_specs = [pl.BlockSpec((tm, D_in), lambda i: (i, 0))]
    for c in range(n_layer):
        w, b = weights[c], biases[c]
        wb_args.extend([w, b])
        wb_bytes += w.size * w.dtype.itemsize + b.size * b.dtype.itemsize
        in_specs.append(pl.BlockSpec(w.shape, lambda i: (0, 0),
                                     pipeline_mode=pl.Buffered(1)))
        in_specs.append(pl.BlockSpec(b.shape, lambda i: (0, 0),
                                     pipeline_mode=pl.Buffered(1)))

    # TODO(synk): add a K/N-tiled fallback (extra grid axis + f32 accumulator
    # scratch) when the resident weight set no longer fits VMEM (v7x: 64 MiB).
    if wb_bytes > 24 * (1 << 20):
        raise NotImplementedError(
            "weight set too large for the VMEM-resident fused-MLP kernel")

    max_feat = max([D_in] + [int(w.shape[1]) for w in weights])
    itemsize = x.dtype.itemsize
    vmem_bytes = (2 * tm * D_in * itemsize            # x, double-buffered
                  + 2 * tm * out_dim * itemsize       # out, double-buffered
                  + wb_bytes                          # weights, single-buffered
                  + tm * max_feat * 4                 # live f32 hidden state
                  + (4 << 20))                        # compiler headroom
    vmem_limit = int(min(max(vmem_bytes, 32 << 20), 64 << 20))

    flops = 2 * B_pad * sum(int(w.shape[0]) * int(w.shape[1]) for w in weights)
    transcendentals = B_pad * sum(int(w.shape[1])
                                  for w, a in zip(weights, acts)
                                  if a in ("xtanh", "sigmoid"))
    bytes_accessed = (x_p.size * itemsize + wb_bytes
                      + B_pad * out_dim * itemsize)

    kernel = functools.partial(_mlp_fused_kernel, acts=tuple(acts), slope=slope)

    out_p = pl.pallas_call(
        kernel,
        out_shape=jax.ShapeDtypeStruct((B_pad, out_dim), x.dtype),
        grid=(B_pad // tm,),
        in_specs=in_specs,
        out_specs=pl.BlockSpec((tm, out_dim), lambda i: (i, 0)),
        compiler_params=pltpu.CompilerParams(
            dimension_semantics=("parallel",),
            vmem_limit_bytes=vmem_limit),
        cost_estimate=pl.CostEstimate(
            flops=int(flops),
            transcendentals=int(transcendentals),
            bytes_accessed=int(bytes_accessed)),
    )(x_p, *wb_args)

    return out_p if B_pad == B else out_p[:B]


# ----------------------------------------------------------------------------
# Module wrapper (mirrors the PyTorch MLP, forward only)
# ----------------------------------------------------------------------------
class MLPPallas:
    def __init__(self, input_dim, output_dim, hidden_dim, n_layer,
                 activation="none", slope=0.1, key=None):
        self.input_dim = input_dim
        self.output_dim = output_dim
        self.n_layer = n_layer
        self.slope = float(slope)
        if isinstance(hidden_dim, (int, float)):
            self.hidden_dim = [int(hidden_dim)] * (n_layer - 1)
        else:
            self.hidden_dim = list(hidden_dim)
        if isinstance(activation, str):
            self.activation = [activation] * (n_layer - 1)
        else:
            self.activation = list(activation)

        if n_layer == 1:
            dims = [(input_dim, output_dim)]
        else:
            dims = [(input_dim, self.hidden_dim[0])]
            for i in range(1, n_layer - 1):
                dims.append((self.hidden_dim[i - 1], self.hidden_dim[i]))
            dims.append((self.hidden_dim[n_layer - 2], output_dim))

        # Deterministic init matching nn.Linear's U(-1/sqrt(fan_in), 1/sqrt(fan_in)).
        if key is None:
            key = jax.random.PRNGKey(0)
        self.weights, self.biases = [], []
        for (d_in, d_out) in dims:
            key, kw, kb = jax.random.split(key, 3)
            bound = 1.0 / float(d_in) ** 0.5
            w = jax.random.uniform(kw, (d_in, d_out), jnp.float32, -bound, bound)
            # stored as [d_in, d_out] (transposed vs PyTorch), bf16 for the MXU
            self.weights.append(w.astype(jnp.bfloat16))
            self.biases.append(
                jax.random.uniform(kb, (1, d_out), jnp.float32, -bound, bound))

        self.acts = tuple(
            "none" if c == n_layer - 1 else self.activation[c]
            for c in range(n_layer))

        # jit once: padding/slicing fuse around the custom call; acts/slope
        # are baked into the partial (static).
        self._forward = jax.jit(functools.partial(
            mlp_forward, acts=self.acts, slope=self.slope))

    def __call__(self, x):
        return self._forward(x, self.weights, self.biases)

    def reference(self, x):
        """Pure-JAX reference (same bf16 operands / f32 accumulation)."""
        h = x.astype(jnp.float32)
        for c in range(self.n_layer):
            h = jnp.dot(h.astype(jnp.bfloat16), self.weights[c],
                        preferred_element_type=jnp.float32) + self.biases[c]
            act = self.acts[c]
            if act == "lrelu":
                h = jnp.where(h >= 0, h, self.slope * h)
            elif act == "xtanh":
                h = jnp.tanh(h) + self.slope * h
            elif act == "sigmoid":
                h = 1.0 / (1.0 + jnp.exp(-h))
        return h


if __name__ == "__main__":
    key = jax.random.PRNGKey(0)
    k_x, k_x3, k_p1, k_p2, k_p3 = jax.random.split(key, 5)

    batch, input_dim, hidden_dim, output_dim = 8, 16, 32, 8
    x = jax.random.normal(k_x, (batch, input_dim), jnp.float32)

    # Config 1: 3-layer lrelu MLP.
    mlp = MLPPallas(input_dim, output_dim, hidden_dim, 3,
                    activation="lrelu", slope=0.1, key=k_p1)
    out = jax.block_until_ready(mlp(x))
    ref = mlp.reference(x)
    assert out.shape == (batch, output_dim)
    assert jnp.allclose(out, ref, atol=1e-4, rtol=1e-4), "mismatch (lrelu)"

    # Config 2: 2-layer xtanh MLP (EUP path, different depth).
    mlp2 = MLPPallas(input_dim, output_dim, hidden_dim, 2,
                     activation="xtanh", slope=0.1, key=k_p2)
    out2 = jax.block_until_ready(mlp2(x))
    ref2 = mlp2.reference(x)
    assert out2.shape == (batch, output_dim)
    assert jnp.allclose(out2, ref2, atol=1e-4, rtol=1e-4), "mismatch (xtanh)"

    # Config 3: sigmoid MLP with a batch that is not a multiple of 8
    # (exercises the row padding + final slice path).
    batch3 = 20
    x3 = jax.random.normal(k_x3, (batch3, input_dim), jnp.float32)
    mlp3 = MLPPallas(input_dim, output_dim, hidden_dim, 3,
                     activation="sigmoid", slope=0.1, key=k_p3)
    out3 = jax.block_until_ready(mlp3(x3))
    ref3 = mlp3.reference(x3)
    assert out3.shape == (batch3, output_dim)
    assert jnp.allclose(out3, ref3, atol=1e-4, rtol=1e-4), "mismatch (sigmoid)"

    print("KERNEL_OK")
</pallas_src>

<mosaic_0001>
module attributes {stable_mosaic.version = 11 : i64} {
  func.func @_mlp_fused_kernel(%arg0: i32, %arg1: memref<8x16xf32, #tpu.memory_space<vmem>>, %arg2: memref<16x32xbf16, #tpu.memory_space<vmem>>, %arg3: memref<1x32xf32, #tpu.memory_space<vmem>>, %arg4: memref<32x32xbf16, #tpu.memory_space<vmem>>, %arg5: memref<1x32xf32, #tpu.memory_space<vmem>>, %arg6: memref<32x8xbf16, #tpu.memory_space<vmem>>, %arg7: memref<1x8xf32, #tpu.memory_space<vmem>>, %arg8: memref<8x8xf32, #tpu.memory_space<vmem>>) attributes {dimension_semantics = [#tpu.dimension_semantics<parallel>], iteration_bounds = array<i64: 1>, scalar_prefetch = 0 : i64, scratch_operands = 0 : i64, tpu.core_type = #tpu.core_type<tc>, window_params = [{transform_indices = @transform_0, window_bounds = array<i64: 8, 16>}, {pipeline_mode = #tpu.pipeline_mode<synchronous>, transform_indices = @transform_1, window_bounds = array<i64: 16, 32>}, {pipeline_mode = #tpu.pipeline_mode<synchronous>, transform_indices = @transform_2, window_bounds = array<i64: 1, 32>}, {pipeline_mode = #tpu.pipeline_mode<synchronous>, transform_indices = @transform_3, window_bounds = array<i64: 32, 32>}, {pipeline_mode = #tpu.pipeline_mode<synchronous>, transform_indices = @transform_4, window_bounds = array<i64: 1, 32>}, {pipeline_mode = #tpu.pipeline_mode<synchronous>, transform_indices = @transform_5, window_bounds = array<i64: 32, 8>}, {pipeline_mode = #tpu.pipeline_mode<synchronous>, transform_indices = @transform_6, window_bounds = array<i64: 1, 8>}, {transform_indices = @transform_7, window_bounds = array<i64: 8, 8>}]} {
    %c0 = arith.constant 0 : index
    %c0_0 = arith.constant 0 : index
    %0 = vector.load %arg1[%c0, %c0_0] : memref<8x16xf32, #tpu.memory_space<vmem>>, vector<8x16xf32>
    %c0_1 = arith.constant 0 : index
    %c0_2 = arith.constant 0 : index
    %1 = vector.load %arg2[%c0_1, %c0_2] : memref<16x32xbf16, #tpu.memory_space<vmem>>, vector<16x32xbf16>
    %c0_3 = arith.constant 0 : index
    %c0_4 = arith.constant 0 : index
    %2 = vector.load %arg3[%c0_3, %c0_4] : memref<1x32xf32, #tpu.memory_space<vmem>>, vector<1x32xf32>
    %3 = arith.truncf %0 : vector<8x16xf32> to vector<8x16xbf16>
    %cst = arith.constant dense<0.000000e+00> : vector<8x32xf32>
    %4 = tpu.matmul %3, %1, %cst {dimension_numbers = #tpu.dot_dimension_numbers<[1], [0], [0], [1], [0, 0, 1, 1], [], []>} : vector<8x16xbf16>, vector<16x32xbf16>, vector<8x32xf32> -> vector<8x32xf32>
    %5 = vector.broadcast %2 : vector<1x32xf32> to vector<8x32xf32>
    %6 = arith.addf %4, %5 : vector<8x32xf32>
    %cst_5 = arith.constant 1.000000e-01 : f32
    %7 = vector.broadcast %cst_5 : f32 to vector<8x32xf32>
    %8 = arith.mulf %7, %6 : vector<8x32xf32>
    %9 = arith.maximumf %6, %8 : vector<8x32xf32>
    %c0_6 = arith.constant 0 : index
    %c0_7 = arith.constant 0 : index
    %10 = vector.load %arg4[%c0_6, %c0_7] : memref<32x32xbf16, #tpu.memory_space<vmem>>, vector<32x32xbf16>
    %c0_8 = arith.constant 0 : index
    %c0_9 = arith.constant 0 : index
    %11 = vector.load %arg5[%c0_8, %c0_9] : memref<1x32xf32, #tpu.memory_space<vmem>>, vector<1x32xf32>
    %12 = arith.truncf %9 : vector<8x32xf32> to vector<8x32xbf16>
    %cst_10 = arith.constant dense<0.000000e+00> : vector<8x32xf32>
    %13 = tpu.matmul %12, %10, %cst_10 {dimension_numbers = #tpu.dot_dimension_numbers<[1], [0], [0], [1], [0, 0, 1, 1], [], []>} : vector<8x32xbf16>, vector<32x32xbf16>, vector<8x32xf32> -> vector<8x32xf32>
    %14 = vector.broadcast %11 : vector<1x32xf32> to vector<8x32xf32>
    %15 = arith.addf %13, %14 : vector<8x32xf32>
    %cst_11 = arith.constant 1.000000e-01 : f32
    %16 = vector.broadcast %cst_11 : f32 to vector<8x32xf32>
    %17 = arith.mulf %16, %15 : vector<8x32xf32>
    %18 = arith.maximumf %15, %17 : vector<8x32xf32>
    %c0_12 = arith.constant 0 : index
    %c0_13 = arith.constant 0 : index
    %19 = vector.load %arg6[%c0_12, %c0_13] : memref<32x8xbf16, #tpu.memory_space<vmem>>, vector<32x8xbf16>
    %c0_14 = arith.constant 0 : index
    %c0_15 = arith.constant 0 : index
    %20 = vector.load %arg7[%c0_14, %c0_15] : memref<1x8xf32, #tpu.memory_space<vmem>>, vector<1x8xf32>
    %21 = arith.truncf %18 : vector<8x32xf32> to vector<8x32xbf16>
    %cst_16 = arith.constant dense<0.000000e+00> : vector<8x8xf32>
    %22 = tpu.matmul %21, %19, %cst_16 {dimension_numbers = #tpu.dot_dimension_numbers<[1], [0], [0], [1], [0, 0, 1, 1], [], []>} : vector<8x32xbf16>, vector<32x8xbf16>, vector<8x8xf32> -> vector<8x8xf32>
    %23 = vector.broadcast %20 : vector<1x8xf32> to vector<8x8xf32>
    %24 = arith.addf %22, %23 : vector<8x8xf32>
    %c0_17 = arith.constant 0 : index
    %c0_18 = arith.constant 0 : index
    %25 = vector.load %arg8[%c0_17, %c0_18] : memref<8x8xf32, #tpu.memory_space<vmem>>, vector<8x8xf32>
    tpu.vector_store %arg8[%c0_17, %c0_18], %24 {strides = array<i32>} : memref<8x8xf32, #tpu.memory_space<vmem>>, vector<8x8xf32>,
    return
  }
  func.func @transform_0(%arg0: i32) -> (i32, i32) {
    %c0_i32 = arith.constant 0 : i32
    %c0_i32_0 = arith.constant 0 : i32
    return %arg0, %c0_i32 : i32, i32
  }
  func.func @transform_1(%arg0: i32) -> (i32, i32) {
    %c0_i32 = arith.constant 0 : i32
    %c0_i32_0 = arith.constant 0 : i32
    %c0_i32_1 = arith.constant 0 : i32
    return %c0_i32, %c0_i32_0 : i32, i32
  }
  func.func @transform_2(%arg0: i32) -> (i32, i32) {
    %c0_i32 = arith.constant 0 : i32
    %c0_i32_0 = arith.constant 0 : i32
    %c0_i32_1 = arith.constant 0 : i32
    return %c0_i32, %c0_i32_0 : i32, i32
  }
  func.func @transform_3(%arg0: i32) -> (i32, i32) {
    %c0_i32 = arith.constant 0 : i32
    %c0_i32_0 = arith.constant 0 : i32
    %c0_i32_1 = arith.constant 0 : i32
    return %c0_i32, %c0_i32_0 : i32, i32
  }
  func.func @transform_4(%arg0: i32) -> (i32, i32) {
    %c0_i32 = arith.constant 0 : i32
    %c0_i32_0 = arith.constant 0 : i32
    %c0_i32_1 = arith.constant 0 : i32
    return %c0_i32, %c0_i32_0 : i32, i32
  }
  func.func @transform_5(%arg0: i32) -> (i32, i32) {
    %c0_i32 = arith.constant 0 : i32
    %c0_i32_0 = arith.constant 0 : i32
    %c0_i32_1 = arith.constant 0 : i32
    return %c0_i32, %c0_i32_0 : i32, i32
  }
  func.func @transform_6(%arg0: i32) -> (i32, i32) {
    %c0_i32 = arith.constant 0 : i32
    %c0_i32_0 = arith.constant 0 : i32
    %c0_i32_1 = arith.constant 0 : i32
    return %c0_i32, %c0_i32_0 : i32, i32
  }
  func.func @transform_7(%arg0: i32) -> (i32, i32) {
    %c0_i32 = arith.constant 0 : i32
    %c0_i32_0 = arith.constant 0 : i32
    return %arg0, %c0_i32 : i32, i32
  }
}

</mosaic_0001>

<llo_original>
// kernel: mlp_forward.1
$region0: #{mlp_forward.1}
  #allocation0 [shape = 'u32[]', space=smem, size = 0x4, offset = 0x4, fixed_abs, tag = 'smem constant byte address 0x4 - core index']
  #allocation1 [shape = 'u32[144,128]{1,0:T(1,128)}', space=vmem, size = 0x12000, scoped, tag = 'internal scratch']
  %s0 = inlined_call_operand.vmem [shape: f32[8,16], index: 0, kind: input, shape index: {}]
  %s1 = inlined_call_operand.hbm [shape: bf16[16,32], index: 1, kind: input, shape index: {}]
  %s2 = inlined_call_operand.vmem [shape: f32[1,32], index: 2, kind: input, shape index: {}]
  %s3 = inlined_call_operand.vmem [shape: bf16[32,32], index: 3, kind: input, shape index: {}]
  %s4 = inlined_call_operand.vmem [shape: f32[1,32], index: 4, kind: input, shape index: {}]
  %s5 = inlined_call_operand.vmem [shape: bf16[32,8], index: 5, kind: input, shape index: {}]
  %s6 = inlined_call_operand.vmem [shape: f32[1,8], index: 6, kind: input, shape index: {}]
  %s7 = inlined_call_operand.hbm [shape: f32[8,8], index: 7, kind: output, shape index: {}]
  %s8 = sld [smem:[#allocation0]]
  $region42: #{mlp_forward.1} parent=0
    _
  %s10 = ssub.s32 1, %s8
  %s11 = scalar_select 0, %s10, %s8
  $region1: #{mlp_forward.1} parent=0
    #allocation2 [shape = 'u8[4096]{0}', space=vmem, size = 0x1000, scoped, tag = 'input window, operand 1, single buffered']
    #allocation3 [shape = 's32[1]{0}', space=sflag, size = 0x4, scoped, tag = 'scoped memory for mlp_forward.1']
    #allocation4 [shape = 's32[1]{0}', space=sflag, size = 0x4, scoped, tag = 'scoped memory for mlp_forward.1']
    #allocation5 [shape = 'u8[4096]{0}', space=vmem, size = 0x1000, scoped, tag = 'output window, operand 0, single buffered']
    %12 = vsyncpa [#allocation3], 0
    %13 = vsyncpa [#allocation4], 0
    // Predicated region
    $region2: #{mlp_forward.1} parent=1 // pred_check
      _
    $region3: #{mlp_forward.1} parent=1 // pred_check_branch
      %15 = sbr.rel (0) target = $region5
    $region4: #{mlp_forward.1} parent=1 // pred_region
      _
    $region5: #{mlp_forward.1} parent=1 // pred_fallthru
      _
    // Predicated region
    $region6: #{mlp_forward.1} parent=1 // pred_check
      _
    $region7: #{mlp_forward.1} parent=1 // pred_check_branch
      %17 = sbr.rel (0) target = $region9
    $region8: #{mlp_forward.1} parent=1 // pred_region
      %s19 = ssub.s32 128, 128
      %20 = vsyncadd [#allocation3], %s19
      %s21 = sshll.u32 [#allocation2], 4
      %s22 = int_to_ptr.vmem [resolvable:$true] %s21
      %27 = dma.hbm_to_vmem [thread:$0]  %s1, 128, %s22, [#allocation3], 64, 64, 4
    $region9: #{mlp_forward.1} parent=1 // pred_fallthru
      _
    // Predicated region
    $region10: #{mlp_forward.1} parent=1 // pred_check
      _
    $region11: #{mlp_forward.1} parent=1 // pred_check_branch
      %29 = sbr.rel (0) target = $region13
    $region12: #{mlp_forward.1} parent=1 // pred_region
      _
    $region13: #{mlp_forward.1} parent=1 // pred_fallthru
      _
    // Predicated region
    $region14: #{mlp_forward.1} parent=1 // pred_check
      _
    $region15: #{mlp_forward.1} parent=1 // pred_check_branch
      %31 = sbr.rel (0) target = $region17
    $region16: #{mlp_forward.1} parent=1 // pred_region
      _
    $region17: #{mlp_forward.1} parent=1 // pred_fallthru
      _
    // Predicated region
    $region18: #{mlp_forward.1} parent=1 // pred_check
      _
    $region19: #{mlp_forward.1} parent=1 // pred_check_branch
      %33 = sbr.rel (0) target = $region21
    $region20: #{mlp_forward.1} parent=1 // pred_region
      _
    $region21: #{mlp_forward.1} parent=1 // pred_fallthru
      _
    // Predicated region
    $region22: #{mlp_forward.1} parent=1 // pred_check
      _
    $region23: #{mlp_forward.1} parent=1 // pred_check_branch
      %35 = sbr.rel (0) target = $region25
    $region24: #{mlp_forward.1} parent=1 // pred_region
      _
    $region25: #{mlp_forward.1} parent=1 // pred_fallthru
      _
    // Predicated region
    $region26: #{mlp_forward.1} parent=1 // pred_check
      _
    $region27: #{mlp_forward.1} parent=1 // pred_check_branch
      %37 = sbr.rel (0) target = $region29
    $region28: #{mlp_forward.1} parent=1 // pred_region
      _
    $region29: #{mlp_forward.1} parent=1 // pred_fallthru
      _
    // Predicated region
    $region30: #{mlp_forward.1} parent=1 // pred_check
      _
    $region31: #{mlp_forward.1} parent=1 // pred_check_branch
      %39 = sbr.rel (0) target = $region33
    $region32: #{mlp_forward.1} parent=1 // pred_region
      %40 = dma.done [#allocation3], 128
    $region33: #{mlp_forward.1} parent=1 // pred_fallthru
      _
    %v42 = vld [vmem:[%s0] sm:$0xff]
    %v43 = vld [vmem:[#allocation2] sm:$0xf]
    %v44 = vld [vmem:[#allocation2 + $0x4] sm:$0xf]
    %v45 = vld [vmem:[%s2] sm:$0x1]
    %v46 = vpack.c.bf16 %v42, %v42
    %v48 = vlaneseq
    %v49 = vshrl.u32 %v48, 7
    %v50 = vsub.s32 0, %v49
    %v51 = vrot.slane %v45, %v50
    %v55 = vunpack.c.l.b16 %v43
    %v56 = vunpack.c.l.b16 %v44
    %v57 = vpack.c.b16 %v56, %v55
    %vm59 = vcmask 130048
    %v61 = vsel %vm59, %v46, 0
    %63 = vmatprep.subr.bf16.mxu0 0
    %64 = vmatpush1.bf16.msra.mxu0 %v57
    %65 = vmatprep.subr.bf16.mxu0 0
    %66 = vmatpush1.bf16.msra.mxu0 0
    %67 = vmatprep.subr.bf16.mxu0 0
    %68 = vmatpush1.bf16.msra.mxu0 0
    %69 = vmatprep.subr.bf16.mxu0 0
    %70 = vmatpush1.bf16.msra.mxu0 0
    %71 = vmatprep.subr.bf16.mxu0 0
    %72 = vmatpush1.bf16.msra.mxu0 0
    %73 = vmatprep.subr.bf16.mxu0 0
    %74 = vmatpush1.bf16.msra.mxu0 0
    %75 = vmatprep.subr.bf16.mxu0 0
    %76 = vmatpush1.bf16.msra.mxu0 0
    %77 = vmatprep.subr.bf16.mxu0 0
    %78 = vmatpush1.bf16.msra.mxu0 0
    %79 = vmatprep.subr.bf16.mxu0 0
    %80 = vmatpush1.bf16.msra.mxu0 0
    %81 = vmatprep.subr.bf16.mxu0 0
    %82 = vmatpush1.bf16.msra.mxu0 0
    %83 = vmatprep.subr.bf16.mxu0 0
    %84 = vmatpush1.bf16.msra.mxu0 0
    %85 = vmatprep.subr.bf16.mxu0 0
    %86 = vmatpush1.bf16.msra.mxu0 0
    %87 = vmatprep.subr.bf16.mxu0 0
    %88 = vmatpush1.bf16.msra.mxu0 0
    %89 = vmatprep.subr.bf16.mxu0 0
    %90 = vmatpush1.bf16.msra.mxu0 0
    %91 = vmatprep.subr.bf16.mxu0 0
    %92 = vmatpush1.bf16.msra.mxu0 0
    %93 = vmatprep.subr.bf16.mxu0 0
    %94 = vmatpush1.bf16.msra.mxu0 0
    %95 = vmatprep.mubr.bf16.mxu0 0
    %96 = vmatmul.mubr.bf16.gmra.mrb[0].mxu0 %v61
    %v97 = vpop.f32.mrb[0].mxu0
    %v98 = vadd.f32 %v51, %v97
    %v99 = vpop.f32.mrb[0].mxu0
    %v100 = vpop.f32.mrb[0].mxu0
    %v101 = vpop.f32.mrb[0].mxu0
    %102 = vdwg.mxu0
    %v103 = vmul.f32 %v98, 0.1
    %v104 = vmax.f32 %v98, %v103
    %v105 = vld [vmem:[%s3] sm:$0xf]
    %v106 = vld [vmem:[%s3 + $0x4] sm:$0xf]
    %v107 = vld [vmem:[%s3 + $0x8] sm:$0xf]
    %v108 = vld [vmem:[%s3 + $0xc] sm:$0xf]
    %v109 = vld [vmem:[%s4] sm:$0x1]
    %v110 = vpack.c.bf16 %v104, %v104
    %v112 = vlaneseq
    %v113 = vshrl.u32 %v112, 7
    %v114 = vsub.s32 0, %v113
    %v115 = vrot.slane %v109, %v114
    %v121 = vunpack.c.l.b16 %v105
    %v122 = vunpack.c.l.b16 %v106
    %v123 = vunpack.c.l.b16 %v107
    %v124 = vunpack.c.l.b16 %v108
    %v125 = vpack.c.b16 %v122, %v121
    %v126 = vpack.c.b16 %v124, %v123
    %vm129 = vcmask 261120
    %v131 = vsel %vm129, %v110, 0
    %133 = vmatprep.subr.bf16.mxu0 0
    %134 = vmatpush1.bf16.msra.mxu0 %v125
    %135 = vmatprep.subr.bf16.mxu0 0
    %136 = vmatpush1.bf16.msra.mxu0 %v126
    %137 = vmatprep.subr.bf16.mxu0 0
    %138 = vmatpush1.bf16.msra.mxu0 0
    %139 = vmatprep.subr.bf16.mxu0 0
    %140 = vmatpush1.bf16.msra.mxu0 0
    %141 = vmatprep.subr.bf16.mxu0 0
    %142 = vmatpush1.bf16.msra.mxu0 0
    %143 = vmatprep.subr.bf16.mxu0 0
    %144 = vmatpush1.bf16.msra.mxu0 0
    %145 = vmatprep.subr.bf16.mxu0 0
    %146 = vmatpush1.bf16.msra.mxu0 0
    %147 = vmatprep.subr.bf16.mxu0 0
    %148 = vmatpush1.bf16.msra.mxu0 0
    %149 = vmatprep.subr.bf16.mxu0 0
    %150 = vmatpush1.bf16.msra.mxu0 0
    %151 = vmatprep.subr.bf16.mxu0 0
    %152 = vmatpush1.bf16.msra.mxu0 0
    %153 = vmatprep.subr.bf16.mxu0 0
    %154 = vmatpush1.bf16.msra.mxu0 0
    %155 = vmatprep.subr.bf16.mxu0 0
    %156 = vmatpush1.bf16.msra.mxu0 0
    %157 = vmatprep.subr.bf16.mxu0 0
    %158 = vmatpush1.bf16.msra.mxu0 0
    %159 = vmatprep.subr.bf16.mxu0 0
    %160 = vmatpush1.bf16.msra.mxu0 0
    %161 = vmatprep.subr.bf16.mxu0 0
    %162 = vmatpush1.bf16.msra.mxu0 0
    %163 = vmatprep.subr.bf16.mxu0 0
    %164 = vmatpush1.bf16.msra.mxu0 0
    %165 = vmatprep.mubr.bf16.mxu0 0
    %166 = vmatmul.mubr.bf16.gmra.mrb[0].mxu0 %v131
    %v167 = vpop.f32.mrb[0].mxu0
    %v168 = vadd.f32 %v115, %v167
    %v169 = vpop.f32.mrb[0].mxu0
    %v170 = vpop.f32.mrb[0].mxu0
    %v171 = vpop.f32.mrb[0].mxu0
    %172 = vdwg.mxu0
    %v173 = vmul.f32 %v168, 0.1
    %v174 = vmax.f32 %v168, %v173
    %v175 = vld [vmem:[%s5] sm:$0xf]
    %v176 = vld [vmem:[%s5 + $0x4] sm:$0xf]
    %v177 = vld [vmem:[%s5 + $0x8] sm:$0xf]
    %v178 = vld [vmem:[%s5 + $0xc] sm:$0xf]
    %v179 = vld [vmem:[%s6] sm:$0x1]
    %v180 = vpack.c.bf16 %v174, %v174
    %v182 = vlaneseq
    %v183 = vshrl.u32 %v182, 7
    %v184 = vsub.s32 0, %v183
    %v185 = vrot.slane %v179, %v184
    %v191 = vunpack.c.l.b16 %v175
    %v192 = vunpack.c.l.b16 %v176
    %v193 = vunpack.c.l.b16 %v177
    %v194 = vunpack.c.l.b16 %v178
    %v195 = vpack.c.b16 %v192, %v191
    %v196 = vpack.c.b16 %v194, %v193
    %v200 = vsel %vm129, %v180, 0
    %202 = vmatprep.subr.bf16.mxu0 0
    %203 = vmatpush1.bf16.msra.mxu0 %v195
    %204 = vmatprep.subr.bf16.mxu0 0
    %205 = vmatpush1.bf16.msra.mxu0 %v196
    %206 = vmatprep.subr.bf16.mxu0 0
    %207 = vmatpush1.bf16.msra.mxu0 0
    %208 = vmatprep.subr.bf16.mxu0 0
    %209 = vmatpush1.bf16.msra.mxu0 0
    %210 = vmatprep.subr.bf16.mxu0 0
    %211 = vmatpush1.bf16.msra.mxu0 0
    %212 = vmatprep.subr.bf16.mxu0 0
    %213 = vmatpush1.bf16.msra.mxu0 0
    %214 = vmatprep.subr.bf16.mxu0 0
    %215 = vmatpush1.bf16.msra.mxu0 0
    %216 = vmatprep.subr.bf16.mxu0 0
    %217 = vmatpush1.bf16.msra.mxu0 0
    %218 = vmatprep.subr.bf16.mxu0 0
    %219 = vmatpush1.bf16.msra.mxu0 0
    %220 = vmatprep.subr.bf16.mxu0 0
    %221 = vmatpush1.bf16.msra.mxu0 0
    %222 = vmatprep.subr.bf16.mxu0 0
    %223 = vmatpush1.bf16.msra.mxu0 0
    %224 = vmatprep.subr.bf16.mxu0 0
    %225 = vmatpush1.bf16.msra.mxu0 0
    %226 = vmatprep.subr.bf16.mxu0 0
    %227 = vmatpush1.bf16.msra.mxu0 0
    %228 = vmatprep.subr.bf16.mxu0 0
    %229 = vmatpush1.bf16.msra.mxu0 0
    %230 = vmatprep.subr.bf16.mxu0 0
    %231 = vmatpush1.bf16.msra.mxu0 0
    %232 = vmatprep.subr.bf16.mxu0 0
    %233 = vmatpush1.bf16.msra.mxu0 0
    %234 = vmatprep.mubr.bf16.mxu0 0
    %235 = vmatmul.mubr.bf16.gmra.mrb[0].mxu0 %v200
    %v236 = vpop.f32.mrb[0].mxu0
    %v237 = vadd.f32 %v185, %v236
    %v238 = vpop.f32.mrb[0].mxu0
    %v239 = vpop.f32.mrb[0].mxu0
    %v240 = vpop.f32.mrb[0].mxu0
    %241 = vdwg.mxu0
    %vm242 = vcmask 64512
    %243 = vst.msk [vmem:[#allocation5] sm:$0xff] %vm242, %v237
    // Predicated region
    $region34: #{mlp_forward.1} parent=1 // pred_check
      _
    $region35: #{mlp_forward.1} parent=1 // pred_check_branch
      %245 = sbr.rel (0) target = $region37
    $region36: #{mlp_forward.1} parent=1 // pred_region
      %s247 = ssub.s32 128, 128
      %248 = vsyncadd [#allocation4], %s247
      %s250 = sshll.u32 [#allocation5], 4
      %s251 = int_to_ptr.vmem [resolvable:$true] %s250
      %253 = dma.vmem_to_hbm [thread:$0]  %s251, 128, %s7, [#allocation4]
    $region37: #{mlp_forward.1} parent=1 // pred_fallthru
      _
    // Predicated region
    $region38: #{mlp_forward.1} parent=1 // pred_check
      _
    $region39: #{mlp_forward.1} parent=1 // pred_check_branch
      %255 = sbr.rel (0) target = $region41
    $region40: #{mlp_forward.1} parent=1 // pred_region
      %256 = dma.done [#allocation4], 128
    $region41: #{mlp_forward.1} parent=1 // pred_fallthru
      _
    %257 = vsyncpa [#allocation3], 1
    %258 = vsyncpa [#allocation4], 1

</llo_original>
